<compile_context>
chip_gen: v5e
topology: v5e:2x2
jax: 0.10.0
libtpu: 0.0.40
codegen_flags: <defaults>
</compile_context>

<pallas_src>
import jax
import jax.numpy as jnp
from jax import lax
from jax.experimental import pallas as pl
from jax.experimental.pallas import tpu as pltpu


VMEM_LIMIT_BYTES = 48 * 1024 * 1024   # < 64 MiB physical (v7x), > default scoped


def _round_up(x, m):
    return ((x + m - 1) // m) * m


# ---------------------------------------------------------------------------
# Exact-erf GELU built from guaranteed-lowerable ops (exp + VPU arithmetic).
# Abramowitz & Stegun 7.1.26, |error| <= 1.5e-7 -> numerically matches
# nn.GELU() (erf) for bf16/f32 forward purposes.
# ---------------------------------------------------------------------------
_ERF_P = 0.3275911
_ERF_A1 = 0.254829592
_ERF_A2 = -0.284496736
_ERF_A3 = 1.421413741
_ERF_A4 = -1.453152027
_ERF_A5 = 1.061405429


def _erf(x):
    sgn = jnp.where(x >= 0.0, 1.0, -1.0)
    a = jnp.abs(x)
    t = 1.0 / (1.0 + _ERF_P * a)
    poly = t * (_ERF_A1 + t * (_ERF_A2 + t * (_ERF_A3 + t * (_ERF_A4 + t * _ERF_A5))))
    return sgn * (1.0 - poly * jnp.exp(-a * a))


def _gelu_exact(x):
    return 0.5 * x * (1.0 + _erf(x * 0.7071067811865476))


# ---------------------------------------------------------------------------
# Stage 1: 3-layer MLP + L2 normalize.  Runs once per batch tile; weights are
# batch-invariant (constant index_map) so they stay resident in VMEM.
# ---------------------------------------------------------------------------
def mlp_kernel(x_ref, w1_ref, b1_ref, w2_ref, b2_ref, w3_ref, b3_ref, h_ref):
    # bf16 MXU operands, f32 accumulation; biases/activations in f32.
    h1 = jnp.dot(x_ref[...], w1_ref[...], preferred_element_type=jnp.float32)
    h1 = _gelu_exact(h1 + b1_ref[...])

    h2 = jnp.dot(h1.astype(w2_ref.dtype), w2_ref[...],
                 preferred_element_type=jnp.float32)
    h2 = _gelu_exact(h2 + b2_ref[...])

    h3 = jnp.dot(h2.astype(w3_ref.dtype), w3_ref[...],
                 preferred_element_type=jnp.float32) + b3_ref[...]

    # F.normalize(h3, dim=-1, eps=1e-12) == x / max(||x||, eps), via EUP rsqrt.
    sumsq = jnp.sum(h3 * h3, axis=-1, keepdims=True)
    h3n = h3 * lax.rsqrt(jnp.maximum(sumsq, 1e-24))
    h_ref[...] = h3n.astype(h_ref.dtype)


# ---------------------------------------------------------------------------
# Stage 2: weight-normalized last layer, tiled over (out-cols OUTER, batch
# INNER) so each V column tile is DMA'd from HBM exactly once.
#   out = (h3n @ V) * col_scale      with col_scale = g / ||V||_col
# ---------------------------------------------------------------------------
def last_layer_kernel(h_ref, v_ref, s_ref, o_ref):
    acc = jnp.dot(h_ref[...], v_ref[...], preferred_element_type=jnp.float32)
    o_ref[...] = (acc * s_ref[...]).astype(o_ref.dtype)


def dino_head_forward(x, params, *, tb=256, tn=2048, out_dtype=jnp.float32):
    """x: [B, in_dim].  params: dict of transposed weights/biases (see init)."""
    B, in_dim = x.shape
    hidden = params["w1"].shape[1]
    bottleneck = params["w3"].shape[1]
    out_dim = params["v"].shape[1]

    cdt = jnp.bfloat16                 # MXU operand dtype
    x = x.astype(cdt)

    # Aligned tiles + zero padding (never fall back to a huge full-dim block).
    TB = min(tb, _round_up(B, 8))           # multiple of 8 (sublanes)
    TN = min(tn, _round_up(out_dim, 128))   # multiple of 128 (lanes)
    B_pad = _round_up(B, TB)
    OUT_pad = _round_up(out_dim, TN)
    nb = B_pad // TB
    nj = OUT_pad // TN

    if B_pad != B:
        x = jnp.pad(x, ((0, B_pad - B), (0, 0)))

    # ------------------------ stage 1: MLP + L2 norm ------------------------
    mlp_cost = pl.CostEstimate(
        flops=2 * B_pad * (in_dim * hidden + hidden * hidden + hidden * bottleneck),
        transcendentals=2 * B_pad * hidden + B_pad,
        bytes_accessed=int(
            B_pad * in_dim * 2
            + (params["w1"].size + params["w2"].size + params["w3"].size) * 2
            + (2 * hidden + bottleneck) * 4
            + B_pad * bottleneck * 2))

    def make_stage1(pipeline_mode):
        def resident(shape):
            # Batch-invariant operand: constant index_map -> loaded once.
            if pipeline_mode is None:
                return pl.BlockSpec(shape, lambda i: (0, 0))
            return pl.BlockSpec(shape, lambda i: (0, 0),
                                pipeline_mode=pipeline_mode)
        return pl.pallas_call(
            mlp_kernel,
            out_shape=jax.ShapeDtypeStruct((B_pad, bottleneck), cdt),
            grid=(nb,),
            in_specs=[
                pl.BlockSpec((TB, in_dim), lambda i: (i, 0)),
                resident((in_dim, hidden)),      # w1
                resident((1, hidden)),           # b1
                resident((hidden, hidden)),      # w2
                resident((1, hidden)),           # b2
                resident((hidden, bottleneck)),  # w3
                resident((1, bottleneck)),       # b3
            ],
            out_specs=pl.BlockSpec((TB, bottleneck), lambda i: (i, 0)),
            compiler_params=pltpu.CompilerParams(
                dimension_semantics=("parallel",),
                vmem_limit_bytes=VMEM_LIMIT_BYTES),
            cost_estimate=mlp_cost,
        )

    stage1_args = (x, params["w1"], params["b1"], params["w2"], params["b2"],
                   params["w3"], params["b3"])
    try:
        # Single-buffer the resident weights (halves their VMEM footprint).
        h3n = make_stage1(pl.Buffered(1))(*stage1_args)
    except Exception:
        # Fallback: default double-buffering (functionally identical).
        h3n = make_stage1(None)(*stage1_args)

    # ---- weight-norm column scale: tiny [1, out_dim], computed once here ----
    v_f32 = params["v"].astype(jnp.float32)
    col_scale = params["g"] * lax.rsqrt(
        jnp.maximum(jnp.sum(v_f32 * v_f32, axis=0, keepdims=True), 1e-24))

    v_bf = params["v"].astype(cdt)
    if OUT_pad != out_dim:
        v_bf = jnp.pad(v_bf, ((0, 0), (0, OUT_pad - out_dim)))
        col_scale = jnp.pad(col_scale, ((0, 0), (0, OUT_pad - out_dim)))

    # ---------------- stage 2: h3n @ V on a (nj, nb) grid --------------------
    # Outer axis = output-column tiles, inner axis = batch tiles.  V's block
    # index is constant across the inner axis, so each V tile is read from HBM
    # exactly once (vs. nb times before).
    out_itemsize = int(jnp.dtype(out_dtype).itemsize)
    last_cost = pl.CostEstimate(
        flops=2 * B_pad * bottleneck * OUT_pad,
        transcendentals=0,
        bytes_accessed=int(
            B_pad * bottleneck * 2 * nj        # h3n re-read per column tile
            + bottleneck * OUT_pad * 2         # V read exactly once
            + OUT_pad * 4                      # column scale
            + B_pad * OUT_pad * out_itemsize)) # output writeback

    out = pl.pallas_call(
        last_layer_kernel,
        out_shape=jax.ShapeDtypeStruct((B_pad, OUT_pad), out_dtype),
        grid=(nj, nb),
        in_specs=[
            pl.BlockSpec((TB, bottleneck), lambda j, i: (i, 0)),  # h3n (small)
            pl.BlockSpec((bottleneck, TN), lambda j, i: (0, j)),  # V: resident over inner axis
            pl.BlockSpec((1, TN), lambda j, i: (0, j)),           # col scale
        ],
        out_specs=pl.BlockSpec((TB, TN), lambda j, i: (i, j)),
        compiler_params=pltpu.CompilerParams(
            # Shard the COLUMN axis across TCs on v7x (disjoint halves of V).
            dimension_semantics=("parallel", "arbitrary"),
            vmem_limit_bytes=VMEM_LIMIT_BYTES),
        cost_estimate=last_cost,
    )(h3n, v_bf, col_scale)

    if (B_pad, OUT_pad) != (B, out_dim):
        out = out[:B, :out_dim]
    return out


def init_params(key, in_dim, hidden_dim, bottleneck_dim, out_dim):
    ks = jax.random.split(key, 4)
    scale = lambda fan_in: 1.0 / jnp.sqrt(fan_in)
    bf = jnp.bfloat16
    params = {
        # weights stored as [in, out] (transpose of PyTorch Linear.weight), bf16
        "w1": (jax.random.normal(ks[0], (in_dim, hidden_dim), jnp.float32)
               * scale(in_dim)).astype(bf),
        "b1": jnp.zeros((1, hidden_dim), jnp.float32),
        "w2": (jax.random.normal(ks[1], (hidden_dim, hidden_dim), jnp.float32)
               * scale(hidden_dim)).astype(bf),
        "b2": jnp.zeros((1, hidden_dim), jnp.float32),
        "w3": (jax.random.normal(ks[2], (hidden_dim, bottleneck_dim), jnp.float32)
               * scale(hidden_dim)).astype(bf),
        "b3": jnp.zeros((1, bottleneck_dim), jnp.float32),
        # weight-norm last layer: V^T and g (DINO inits weight_g to 1)
        "v": (jax.random.normal(ks[3], (bottleneck_dim, out_dim), jnp.float32)
              * scale(bottleneck_dim)).astype(bf),
        "g": jnp.ones((1, out_dim), jnp.float32),
    }
    return params


def reference_forward(x, p):
    f32 = lambda a: a.astype(jnp.float32)
    h = jax.nn.gelu(f32(x) @ f32(p["w1"]) + p["b1"], approximate=False)
    h = jax.nn.gelu(h @ f32(p["w2"]) + p["b2"], approximate=False)
    h = h @ f32(p["w3"]) + p["b3"]
    h = h / jnp.maximum(jnp.linalg.norm(h, axis=-1, keepdims=True), 1e-12)
    v = f32(p["v"])
    w = v * (p["g"] / jnp.maximum(jnp.linalg.norm(v, axis=0, keepdims=True), 1e-12))
    return h @ w

# TODO(synk): cancel_last_layer_gradients() is a training-time hook (zeroing
# last-layer grads for early epochs) with no forward-pass / Pallas equivalent.


if __name__ == "__main__":
    B, IN_DIM, HIDDEN, BOTTLENECK, OUT_DIM = 8, 32, 64, 32, 128

    key = jax.random.PRNGKey(0)
    kx, kp = jax.random.split(key)
    x = jax.random.normal(kx, (B, IN_DIM), jnp.float32).astype(jnp.bfloat16)
    params = init_params(kp, IN_DIM, HIDDEN, BOTTLENECK, OUT_DIM)

    out = dino_head_forward(x, params)
    out = jax.block_until_ready(out)

    ref = reference_forward(x, params)
    assert out.shape == (B, OUT_DIM)
    max_err = jnp.max(jnp.abs(out - ref))
    assert jnp.allclose(out, ref, atol=2e-2, rtol=2e-2), (
        f"mismatch vs JAX reference (max |err| = {max_err})")

    print("KERNEL_OK")
</pallas_src>

<mosaic_0001>
module attributes {stable_mosaic.version = 11 : i64} {
  func.func @mlp_kernel(%arg0: i32, %arg1: memref<8x32xbf16, #tpu.memory_space<vmem>>, %arg2: memref<32x64xbf16, #tpu.memory_space<vmem>>, %arg3: memref<1x64xf32, #tpu.memory_space<vmem>>, %arg4: memref<64x64xbf16, #tpu.memory_space<vmem>>, %arg5: memref<1x64xf32, #tpu.memory_space<vmem>>, %arg6: memref<64x32xbf16, #tpu.memory_space<vmem>>, %arg7: memref<1x32xf32, #tpu.memory_space<vmem>>, %arg8: memref<8x32xbf16, #tpu.memory_space<vmem>>) attributes {dimension_semantics = [#tpu.dimension_semantics<parallel>], iteration_bounds = array<i64: 1>, scalar_prefetch = 0 : i64, scratch_operands = 0 : i64, tpu.core_type = #tpu.core_type<tc>, window_params = [{transform_indices = @transform_0, window_bounds = array<i64: 8, 32>}, {pipeline_mode = #tpu.pipeline_mode<synchronous>, transform_indices = @transform_1, window_bounds = array<i64: 32, 64>}, {pipeline_mode = #tpu.pipeline_mode<synchronous>, transform_indices = @transform_2, window_bounds = array<i64: 1, 64>}, {pipeline_mode = #tpu.pipeline_mode<synchronous>, transform_indices = @transform_3, window_bounds = array<i64: 64, 64>}, {pipeline_mode = #tpu.pipeline_mode<synchronous>, transform_indices = @transform_4, window_bounds = array<i64: 1, 64>}, {pipeline_mode = #tpu.pipeline_mode<synchronous>, transform_indices = @transform_5, window_bounds = array<i64: 64, 32>}, {pipeline_mode = #tpu.pipeline_mode<synchronous>, transform_indices = @transform_6, window_bounds = array<i64: 1, 32>}, {transform_indices = @transform_7, window_bounds = array<i64: 8, 32>}]} {
    %c0 = arith.constant 0 : index
    %c0_0 = arith.constant 0 : index
    %0 = vector.load %arg1[%c0, %c0_0] : memref<8x32xbf16, #tpu.memory_space<vmem>>, vector<8x32xbf16>
    %c0_1 = arith.constant 0 : index
    %c0_2 = arith.constant 0 : index
    %1 = vector.load %arg2[%c0_1, %c0_2] : memref<32x64xbf16, #tpu.memory_space<vmem>>, vector<32x64xbf16>
    %cst = arith.constant dense<0.000000e+00> : vector<8x64xf32>
    %2 = tpu.matmul %0, %1, %cst {dimension_numbers = #tpu.dot_dimension_numbers<[1], [0], [0], [1], [0, 0, 1, 1], [], []>} : vector<8x32xbf16>, vector<32x64xbf16>, vector<8x64xf32> -> vector<8x64xf32>
    %c0_3 = arith.constant 0 : index
    %c0_4 = arith.constant 0 : index
    %3 = vector.load %arg3[%c0_3, %c0_4] : memref<1x64xf32, #tpu.memory_space<vmem>>, vector<1x64xf32>
    %4 = vector.broadcast %3 : vector<1x64xf32> to vector<8x64xf32>
    %5 = arith.addf %2, %4 : vector<8x64xf32>
    %cst_5 = arith.constant 5.000000e-01 : f32
    %6 = vector.broadcast %cst_5 : f32 to vector<8x64xf32>
    %7 = arith.mulf %6, %5 : vector<8x64xf32>
    %cst_6 = arith.constant 0.707106769 : f32
    %8 = vector.broadcast %cst_6 : f32 to vector<8x64xf32>
    %9 = arith.mulf %5, %8 : vector<8x64xf32>
    %cst_7 = arith.constant 0.000000e+00 : f32
    %10 = vector.broadcast %cst_7 : f32 to vector<8x64xf32>
    %11 = arith.cmpf oge, %9, %10 : vector<8x64xf32>
    %cst_8 = arith.constant 1.000000e+00 : f32
    %cst_9 = arith.constant -1.000000e+00 : f32
    %12 = vector.broadcast %cst_8 : f32 to vector<8x64xf32>
    %13 = vector.broadcast %cst_9 : f32 to vector<8x64xf32>
    %14 = arith.select %11, %12, %13 : vector<8x64xi1>, vector<8x64xf32>
    %15 = math.absf %9 : vector<8x64xf32>
    %cst_10 = arith.constant 0.327591091 : f32
    %16 = vector.broadcast %cst_10 : f32 to vector<8x64xf32>
    %17 = arith.mulf %16, %15 : vector<8x64xf32>
    %cst_11 = arith.constant 1.000000e+00 : f32
    %18 = vector.broadcast %cst_11 : f32 to vector<8x64xf32>
    %19 = arith.addf %18, %17 : vector<8x64xf32>
    %cst_12 = arith.constant 1.000000e+00 : f32
    %20 = vector.broadcast %cst_12 : f32 to vector<8x64xf32>
    %21 = arith.divf %20, %19 : vector<8x64xf32>
    %cst_13 = arith.constant 1.06140542 : f32
    %22 = vector.broadcast %cst_13 : f32 to vector<8x64xf32>
    %23 = arith.mulf %21, %22 : vector<8x64xf32>
    %cst_14 = arith.constant -1.45315206 : f32
    %24 = vector.broadcast %cst_14 : f32 to vector<8x64xf32>
    %25 = arith.addf %24, %23 : vector<8x64xf32>
    %26 = arith.mulf %21, %25 : vector<8x64xf32>
    %cst_15 = arith.constant 1.42141378 : f32
    %27 = vector.broadcast %cst_15 : f32 to vector<8x64xf32>
    %28 = arith.addf %27, %26 : vector<8x64xf32>
    %29 = arith.mulf %21, %28 : vector<8x64xf32>
    %cst_16 = arith.constant -0.284496725 : f32
    %30 = vector.broadcast %cst_16 : f32 to vector<8x64xf32>
    %31 = arith.addf %30, %29 : vector<8x64xf32>
    %32 = arith.mulf %21, %31 : vector<8x64xf32>
    %cst_17 = arith.constant 0.254829586 : f32
    %33 = vector.broadcast %cst_17 : f32 to vector<8x64xf32>
    %34 = arith.addf %33, %32 : vector<8x64xf32>
    %35 = arith.mulf %21, %34 : vector<8x64xf32>
    %cst_18 = arith.constant 0.000000e+00 : f32
    %36 = vector.broadcast %cst_18 : f32 to vector<8x64xf32>
    %37 = arith.subf %36, %15 : vector<8x64xf32>
    %38 = arith.mulf %37, %15 : vector<8x64xf32>
    %39 = math.exp %38 : vector<8x64xf32>
    %40 = arith.mulf %35, %39 : vector<8x64xf32>
    %cst_19 = arith.constant 1.000000e+00 : f32
    %41 = vector.broadcast %cst_19 : f32 to vector<8x64xf32>
    %42 = arith.subf %41, %40 : vector<8x64xf32>
    %43 = arith.mulf %14, %42 : vector<8x64xf32>
    %cst_20 = arith.constant 1.000000e+00 : f32
    %44 = vector.broadcast %cst_20 : f32 to vector<8x64xf32>
    %45 = arith.addf %44, %43 : vector<8x64xf32>
    %46 = arith.mulf %7, %45 : vector<8x64xf32>
    %47 = arith.truncf %46 : vector<8x64xf32> to vector<8x64xbf16>
    %c0_21 = arith.constant 0 : index
    %c0_22 = arith.constant 0 : index
    %48 = vector.load %arg4[%c0_21, %c0_22] : memref<64x64xbf16, #tpu.memory_space<vmem>>, vector<64x64xbf16>
    %cst_23 = arith.constant dense<0.000000e+00> : vector<8x64xf32>
    %49 = tpu.matmul %47, %48, %cst_23 {dimension_numbers = #tpu.dot_dimension_numbers<[1], [0], [0], [1], [0, 0, 1, 1], [], []>} : vector<8x64xbf16>, vector<64x64xbf16>, vector<8x64xf32> -> vector<8x64xf32>
    %c0_24 = arith.constant 0 : index
    %c0_25 = arith.constant 0 : index
    %50 = vector.load %arg5[%c0_24, %c0_25] : memref<1x64xf32, #tpu.memory_space<vmem>>, vector<1x64xf32>
    %51 = vector.broadcast %50 : vector<1x64xf32> to vector<8x64xf32>
    %52 = arith.addf %49, %51 : vector<8x64xf32>
    %cst_26 = arith.constant 5.000000e-01 : f32
    %53 = vector.broadcast %cst_26 : f32 to vector<8x64xf32>
    %54 = arith.mulf %53, %52 : vector<8x64xf32>
    %cst_27 = arith.constant 0.707106769 : f32
    %55 = vector.broadcast %cst_27 : f32 to vector<8x64xf32>
    %56 = arith.mulf %52, %55 : vector<8x64xf32>
    %cst_28 = arith.constant 0.000000e+00 : f32
    %57 = vector.broadcast %cst_28 : f32 to vector<8x64xf32>
    %58 = arith.cmpf oge, %56, %57 : vector<8x64xf32>
    %cst_29 = arith.constant 1.000000e+00 : f32
    %cst_30 = arith.constant -1.000000e+00 : f32
    %59 = vector.broadcast %cst_29 : f32 to vector<8x64xf32>
    %60 = vector.broadcast %cst_30 : f32 to vector<8x64xf32>
    %61 = arith.select %58, %59, %60 : vector<8x64xi1>, vector<8x64xf32>
    %62 = math.absf %56 : vector<8x64xf32>
    %cst_31 = arith.constant 0.327591091 : f32
    %63 = vector.broadcast %cst_31 : f32 to vector<8x64xf32>
    %64 = arith.mulf %63, %62 : vector<8x64xf32>
    %cst_32 = arith.constant 1.000000e+00 : f32
    %65 = vector.broadcast %cst_32 : f32 to vector<8x64xf32>
    %66 = arith.addf %65, %64 : vector<8x64xf32>
    %cst_33 = arith.constant 1.000000e+00 : f32
    %67 = vector.broadcast %cst_33 : f32 to vector<8x64xf32>
    %68 = arith.divf %67, %66 : vector<8x64xf32>
    %cst_34 = arith.constant 1.06140542 : f32
    %69 = vector.broadcast %cst_34 : f32 to vector<8x64xf32>
    %70 = arith.mulf %68, %69 : vector<8x64xf32>
    %cst_35 = arith.constant -1.45315206 : f32
    %71 = vector.broadcast %cst_35 : f32 to vector<8x64xf32>
    %72 = arith.addf %71, %70 : vector<8x64xf32>
    %73 = arith.mulf %68, %72 : vector<8x64xf32>
    %cst_36 = arith.constant 1.42141378 : f32
    %74 = vector.broadcast %cst_36 : f32 to vector<8x64xf32>
    %75 = arith.addf %74, %73 : vector<8x64xf32>
    %76 = arith.mulf %68, %75 : vector<8x64xf32>
    %cst_37 = arith.constant -0.284496725 : f32
    %77 = vector.broadcast %cst_37 : f32 to vector<8x64xf32>
    %78 = arith.addf %77, %76 : vector<8x64xf32>
    %79 = arith.mulf %68, %78 : vector<8x64xf32>
    %cst_38 = arith.constant 0.254829586 : f32
    %80 = vector.broadcast %cst_38 : f32 to vector<8x64xf32>
    %81 = arith.addf %80, %79 : vector<8x64xf32>
    %82 = arith.mulf %68, %81 : vector<8x64xf32>
    %cst_39 = arith.constant 0.000000e+00 : f32
    %83 = vector.broadcast %cst_39 : f32 to vector<8x64xf32>
    %84 = arith.subf %83, %62 : vector<8x64xf32>
    %85 = arith.mulf %84, %62 : vector<8x64xf32>
    %86 = math.exp %85 : vector<8x64xf32>
    %87 = arith.mulf %82, %86 : vector<8x64xf32>
    %cst_40 = arith.constant 1.000000e+00 : f32
    %88 = vector.broadcast %cst_40 : f32 to vector<8x64xf32>
    %89 = arith.subf %88, %87 : vector<8x64xf32>
    %90 = arith.mulf %61, %89 : vector<8x64xf32>
    %cst_41 = arith.constant 1.000000e+00 : f32
    %91 = vector.broadcast %cst_41 : f32 to vector<8x64xf32>
    %92 = arith.addf %91, %90 : vector<8x64xf32>
    %93 = arith.mulf %54, %92 : vector<8x64xf32>
    %94 = arith.truncf %93 : vector<8x64xf32> to vector<8x64xbf16>
    %c0_42 = arith.constant 0 : index
    %c0_43 = arith.constant 0 : index
    %95 = vector.load %arg6[%c0_42, %c0_43] : memref<64x32xbf16, #tpu.memory_space<vmem>>, vector<64x32xbf16>
    %cst_44 = arith.constant dense<0.000000e+00> : vector<8x32xf32>
    %96 = tpu.matmul %94, %95, %cst_44 {dimension_numbers = #tpu.dot_dimension_numbers<[1], [0], [0], [1], [0, 0, 1, 1], [], []>} : vector<8x64xbf16>, vector<64x32xbf16>, vector<8x32xf32> -> vector<8x32xf32>
    %c0_45 = arith.constant 0 : index
    %c0_46 = arith.constant 0 : index
    %97 = vector.load %arg7[%c0_45, %c0_46] : memref<1x32xf32, #tpu.memory_space<vmem>>, vector<1x32xf32>
    %98 = vector.broadcast %97 : vector<1x32xf32> to vector<8x32xf32>
    %99 = arith.addf %96, %98 : vector<8x32xf32>
    %100 = arith.mulf %99, %99 : vector<8x32xf32>
    %cst_47 = arith.constant dense<0.000000e+00> : vector<8xf32>
    %101 = vector.multi_reduction <add>, %100, %cst_47 [1] : vector<8x32xf32> to vector<8xf32>
    %102 = vector.shape_cast %101 : vector<8xf32> to vector<8x1xf32>
    %cst_48 = arith.constant 1.000000e-24 : f32
    %103 = vector.broadcast %cst_48 : f32 to vector<8x1xf32>
    %104 = arith.maximumf %102, %103 : vector<8x1xf32>
    %105 = math.rsqrt %104 : vector<8x1xf32>
    %106 = vector.broadcast %105 : vector<8x1xf32> to vector<8x32xf32>
    %107 = arith.mulf %99, %106 : vector<8x32xf32>
    %108 = arith.truncf %107 : vector<8x32xf32> to vector<8x32xbf16>
    %c0_49 = arith.constant 0 : index
    %c0_50 = arith.constant 0 : index
    %109 = vector.load %arg8[%c0_49, %c0_50] : memref<8x32xbf16, #tpu.memory_space<vmem>>, vector<8x32xbf16>
    tpu.vector_store %arg8[%c0_49, %c0_50], %108 {strides = array<i32>} : memref<8x32xbf16, #tpu.memory_space<vmem>>, vector<8x32xbf16>,
    return
  }
  func.func @transform_0(%arg0: i32) -> (i32, i32) {
    %c0_i32 = arith.constant 0 : i32
    %c0_i32_0 = arith.constant 0 : i32
    return %arg0, %c0_i32 : i32, i32
  }
  func.func @transform_1(%arg0: i32) -> (i32, i32) {
    %c0_i32 = arith.constant 0 : i32
    %c0_i32_0 = arith.constant 0 : i32
    %c0_i32_1 = arith.constant 0 : i32
    return %c0_i32, %c0_i32_0 : i32, i32
  }
  func.func @transform_2(%arg0: i32) -> (i32, i32) {
    %c0_i32 = arith.constant 0 : i32
    %c0_i32_0 = arith.constant 0 : i32
    %c0_i32_1 = arith.constant 0 : i32
    return %c0_i32, %c0_i32_0 : i32, i32
  }
  func.func @transform_3(%arg0: i32) -> (i32, i32) {
    %c0_i32 = arith.constant 0 : i32
    %c0_i32_0 = arith.constant 0 : i32
    %c0_i32_1 = arith.constant 0 : i32
    return %c0_i32, %c0_i32_0 : i32, i32
  }
  func.func @transform_4(%arg0: i32) -> (i32, i32) {
    %c0_i32 = arith.constant 0 : i32
    %c0_i32_0 = arith.constant 0 : i32
    %c0_i32_1 = arith.constant 0 : i32
    return %c0_i32, %c0_i32_0 : i32, i32
  }
  func.func @transform_5(%arg0: i32) -> (i32, i32) {
    %c0_i32 = arith.constant 0 : i32
    %c0_i32_0 = arith.constant 0 : i32
    %c0_i32_1 = arith.constant 0 : i32
    return %c0_i32, %c0_i32_0 : i32, i32
  }
  func.func @transform_6(%arg0: i32) -> (i32, i32) {
    %c0_i32 = arith.constant 0 : i32
    %c0_i32_0 = arith.constant 0 : i32
    %c0_i32_1 = arith.constant 0 : i32
    return %c0_i32, %c0_i32_0 : i32, i32
  }
  func.func @transform_7(%arg0: i32) -> (i32, i32) {
    %c0_i32 = arith.constant 0 : i32
    %c0_i32_0 = arith.constant 0 : i32
    return %arg0, %c0_i32 : i32, i32
  }
}

module attributes {stable_mosaic.version = 11 : i64} {
  func.func @mlp_kernel(%arg0: i32, %arg1: memref<8x32xbf16, #tpu.memory_space<vmem>>, %arg2: memref<32x64xbf16, #tpu.memory_space<vmem>>, %arg3: memref<1x64xf32, #tpu.memory_space<vmem>>, %arg4: memref<64x64xbf16, #tpu.memory_space<vmem>>, %arg5: memref<1x64xf32, #tpu.memory_space<vmem>>, %arg6: memref<64x32xbf16, #tpu.memory_space<vmem>>, %arg7: memref<1x32xf32, #tpu.memory_space<vmem>>, %arg8: memref<8x32xbf16, #tpu.memory_space<vmem>>) attributes {dimension_semantics = [#tpu.dimension_semantics<parallel>], iteration_bounds = array<i64: 1>, scalar_prefetch = 0 : i64, scratch_operands = 0 : i64, tpu.core_type = #tpu.core_type<tc>, window_params = [{transform_indices = @transform_0, window_bounds = array<i64: 8, 32>}, {pipeline_mode = #tpu.pipeline_mode<synchronous>, transform_indices = @transform_1, window_bounds = array<i64: 32, 64>}, {pipeline_mode = #tpu.pipeline_mode<synchronous>, transform_indices = @transform_2, window_bounds = array<i64: 1, 64>}, {pipeline_mode = #tpu.pipeline_mode<synchronous>, transform_indices = @transform_3, window_bounds = array<i64: 64, 64>}, {pipeline_mode = #tpu.pipeline_mode<synchronous>, transform_indices = @transform_4, window_bounds = array<i64: 1, 64>}, {pipeline_mode = #tpu.pipeline_mode<synchronous>, transform_indices = @transform_5, window_bounds = array<i64: 64, 32>}, {pipeline_mode = #tpu.pipeline_mode<synchronous>, transform_indices = @transform_6, window_bounds = array<i64: 1, 32>}, {transform_indices = @transform_7, window_bounds = array<i64: 8, 32>}]} {
    %c0 = arith.constant 0 : index
    %c0_0 = arith.constant 0 : index
    %0 = vector.load %arg1[%c0, %c0_0] : memref<8x32xbf16, #tpu.memory_space<vmem>>, vector<8x32xbf16>
    %c0_1 = arith.constant 0 : index
    %c0_2 = arith.constant 0 : index
    %1 = vector.load %arg2[%c0_1, %c0_2] : memref<32x64xbf16, #tpu.memory_space<vmem>>, vector<32x64xbf16>
    %cst = arith.constant dense<0.000000e+00> : vector<8x64xf32>
    %2 = tpu.matmul %0, %1, %cst {dimension_numbers = #tpu.dot_dimension_numbers<[1], [0], [0], [1], [0, 0, 1, 1], [], []>} : vector<8x32xbf16>, vector<32x64xbf16>, vector<8x64xf32> -> vector<8x64xf32>
    %c0_3 = arith.constant 0 : index
    %c0_4 = arith.constant 0 : index
    %3 = vector.load %arg3[%c0_3, %c0_4] : memref<1x64xf32, #tpu.memory_space<vmem>>, vector<1x64xf32>
    %4 = vector.broadcast %3 : vector<1x64xf32> to vector<8x64xf32>
    %5 = arith.addf %2, %4 : vector<8x64xf32>
    %cst_5 = arith.constant 5.000000e-01 : f32
    %6 = vector.broadcast %cst_5 : f32 to vector<8x64xf32>
    %7 = arith.mulf %6, %5 : vector<8x64xf32>
    %cst_6 = arith.constant 0.707106769 : f32
    %8 = vector.broadcast %cst_6 : f32 to vector<8x64xf32>
    %9 = arith.mulf %5, %8 : vector<8x64xf32>
    %cst_7 = arith.constant 0.000000e+00 : f32
    %10 = vector.broadcast %cst_7 : f32 to vector<8x64xf32>
    %11 = arith.cmpf oge, %9, %10 : vector<8x64xf32>
    %cst_8 = arith.constant 1.000000e+00 : f32
    %cst_9 = arith.constant -1.000000e+00 : f32
    %12 = vector.broadcast %cst_8 : f32 to vector<8x64xf32>
    %13 = vector.broadcast %cst_9 : f32 to vector<8x64xf32>
    %14 = arith.select %11, %12, %13 : vector<8x64xi1>, vector<8x64xf32>
    %15 = math.absf %9 : vector<8x64xf32>
    %cst_10 = arith.constant 0.327591091 : f32
    %16 = vector.broadcast %cst_10 : f32 to vector<8x64xf32>
    %17 = arith.mulf %16, %15 : vector<8x64xf32>
    %cst_11 = arith.constant 1.000000e+00 : f32
    %18 = vector.broadcast %cst_11 : f32 to vector<8x64xf32>
    %19 = arith.addf %18, %17 : vector<8x64xf32>
    %cst_12 = arith.constant 1.000000e+00 : f32
    %20 = vector.broadcast %cst_12 : f32 to vector<8x64xf32>
    %21 = arith.divf %20, %19 : vector<8x64xf32>
    %cst_13 = arith.constant 1.06140542 : f32
    %22 = vector.broadcast %cst_13 : f32 to vector<8x64xf32>
    %23 = arith.mulf %21, %22 : vector<8x64xf32>
    %cst_14 = arith.constant -1.45315206 : f32
    %24 = vector.broadcast %cst_14 : f32 to vector<8x64xf32>
    %25 = arith.addf %24, %23 : vector<8x64xf32>
    %26 = arith.mulf %21, %25 : vector<8x64xf32>
    %cst_15 = arith.constant 1.42141378 : f32
    %27 = vector.broadcast %cst_15 : f32 to vector<8x64xf32>
    %28 = arith.addf %27, %26 : vector<8x64xf32>
    %29 = arith.mulf %21, %28 : vector<8x64xf32>
    %cst_16 = arith.constant -0.284496725 : f32
    %30 = vector.broadcast %cst_16 : f32 to vector<8x64xf32>
    %31 = arith.addf %30, %29 : vector<8x64xf32>
    %32 = arith.mulf %21, %31 : vector<8x64xf32>
    %cst_17 = arith.constant 0.254829586 : f32
    %33 = vector.broadcast %cst_17 : f32 to vector<8x64xf32>
    %34 = arith.addf %33, %32 : vector<8x64xf32>
    %35 = arith.mulf %21, %34 : vector<8x64xf32>
    %cst_18 = arith.constant 0.000000e+00 : f32
    %36 = vector.broadcast %cst_18 : f32 to vector<8x64xf32>
    %37 = arith.subf %36, %15 : vector<8x64xf32>
    %38 = arith.mulf %37, %15 : vector<8x64xf32>
    %39 = math.exp %38 : vector<8x64xf32>
    %40 = arith.mulf %35, %39 : vector<8x64xf32>
    %cst_19 = arith.constant 1.000000e+00 : f32
    %41 = vector.broadcast %cst_19 : f32 to vector<8x64xf32>
    %42 = arith.subf %41, %40 : vector<8x64xf32>
    %43 = arith.mulf %14, %42 : vector<8x64xf32>
    %cst_20 = arith.constant 1.000000e+00 : f32
    %44 = vector.broadcast %cst_20 : f32 to vector<8x64xf32>
    %45 = arith.addf %44, %43 : vector<8x64xf32>
    %46 = arith.mulf %7, %45 : vector<8x64xf32>
    %47 = arith.truncf %46 : vector<8x64xf32> to vector<8x64xbf16>
    %c0_21 = arith.constant 0 : index
    %c0_22 = arith.constant 0 : index
    %48 = vector.load %arg4[%c0_21, %c0_22] : memref<64x64xbf16, #tpu.memory_space<vmem>>, vector<64x64xbf16>
    %cst_23 = arith.constant dense<0.000000e+00> : vector<8x64xf32>
    %49 = tpu.matmul %47, %48, %cst_23 {dimension_numbers = #tpu.dot_dimension_numbers<[1], [0], [0], [1], [0, 0, 1, 1], [], []>} : vector<8x64xbf16>, vector<64x64xbf16>, vector<8x64xf32> -> vector<8x64xf32>
    %c0_24 = arith.constant 0 : index
    %c0_25 = arith.constant 0 : index
    %50 = vector.load %arg5[%c0_24, %c0_25] : memref<1x64xf32, #tpu.memory_space<vmem>>, vector<1x64xf32>
    %51 = vector.broadcast %50 : vector<1x64xf32> to vector<8x64xf32>
    %52 = arith.addf %49, %51 : vector<8x64xf32>
    %cst_26 = arith.constant 5.000000e-01 : f32
    %53 = vector.broadcast %cst_26 : f32 to vector<8x64xf32>
    %54 = arith.mulf %53, %52 : vector<8x64xf32>
    %cst_27 = arith.constant 0.707106769 : f32
    %55 = vector.broadcast %cst_27 : f32 to vector<8x64xf32>
    %56 = arith.mulf %52, %55 : vector<8x64xf32>
    %cst_28 = arith.constant 0.000000e+00 : f32
    %57 = vector.broadcast %cst_28 : f32 to vector<8x64xf32>
    %58 = arith.cmpf oge, %56, %57 : vector<8x64xf32>
    %cst_29 = arith.constant 1.000000e+00 : f32
    %cst_30 = arith.constant -1.000000e+00 : f32
    %59 = vector.broadcast %cst_29 : f32 to vector<8x64xf32>
    %60 = vector.broadcast %cst_30 : f32 to vector<8x64xf32>
    %61 = arith.select %58, %59, %60 : vector<8x64xi1>, vector<8x64xf32>
    %62 = math.absf %56 : vector<8x64xf32>
    %cst_31 = arith.constant 0.327591091 : f32
    %63 = vector.broadcast %cst_31 : f32 to vector<8x64xf32>
    %64 = arith.mulf %63, %62 : vector<8x64xf32>
    %cst_32 = arith.constant 1.000000e+00 : f32
    %65 = vector.broadcast %cst_32 : f32 to vector<8x64xf32>
    %66 = arith.addf %65, %64 : vector<8x64xf32>
    %cst_33 = arith.constant 1.000000e+00 : f32
    %67 = vector.broadcast %cst_33 : f32 to vector<8x64xf32>
    %68 = arith.divf %67, %66 : vector<8x64xf32>
    %cst_34 = arith.constant 1.06140542 : f32
    %69 = vector.broadcast %cst_34 : f32 to vector<8x64xf32>
    %70 = arith.mulf %68, %69 : vector<8x64xf32>
    %cst_35 = arith.constant -1.45315206 : f32
    %71 = vector.broadcast %cst_35 : f32 to vector<8x64xf32>
    %72 = arith.addf %71, %70 : vector<8x64xf32>
    %73 = arith.mulf %68, %72 : vector<8x64xf32>
    %cst_36 = arith.constant 1.42141378 : f32
    %74 = vector.broadcast %cst_36 : f32 to vector<8x64xf32>
    %75 = arith.addf %74, %73 : vector<8x64xf32>
    %76 = arith.mulf %68, %75 : vector<8x64xf32>
    %cst_37 = arith.constant -0.284496725 : f32
    %77 = vector.broadcast %cst_37 : f32 to vector<8x64xf32>
    %78 = arith.addf %77, %76 : vector<8x64xf32>
    %79 = arith.mulf %68, %78 : vector<8x64xf32>
    %cst_38 = arith.constant 0.254829586 : f32
    %80 = vector.broadcast %cst_38 : f32 to vector<8x64xf32>
    %81 = arith.addf %80, %79 : vector<8x64xf32>
    %82 = arith.mulf %68, %81 : vector<8x64xf32>
    %cst_39 = arith.constant 0.000000e+00 : f32
    %83 = vector.broadcast %cst_39 : f32 to vector<8x64xf32>
    %84 = arith.subf %83, %62 : vector<8x64xf32>
    %85 = arith.mulf %84, %62 : vector<8x64xf32>
    %86 = math.exp %85 : vector<8x64xf32>
    %87 = arith.mulf %82, %86 : vector<8x64xf32>
    %cst_40 = arith.constant 1.000000e+00 : f32
    %88 = vector.broadcast %cst_40 : f32 to vector<8x64xf32>
    %89 = arith.subf %88, %87 : vector<8x64xf32>
    %90 = arith.mulf %61, %89 : vector<8x64xf32>
    %cst_41 = arith.constant 1.000000e+00 : f32
    %91 = vector.broadcast %cst_41 : f32 to vector<8x64xf32>
    %92 = arith.addf %91, %90 : vector<8x64xf32>
    %93 = arith.mulf %54, %92 : vector<8x64xf32>
    %94 = arith.truncf %93 : vector<8x64xf32> to vector<8x64xbf16>
    %c0_42 = arith.constant 0 : index
    %c0_43 = arith.constant 0 : index
    %95 = vector.load %arg6[%c0_42, %c0_43] : memref<64x32xbf16, #tpu.memory_space<vmem>>, vector<64x32xbf16>
    %cst_44 = arith.constant dense<0.000000e+00> : vector<8x32xf32>
    %96 = tpu.matmul %94, %95, %cst_44 {dimension_numbers = #tpu.dot_dimension_numbers<[1], [0], [0], [1], [0, 0, 1, 1], [], []>} : vector<8x64xbf16>, vector<64x32xbf16>, vector<8x32xf32> -> vector<8x32xf32>
    %c0_45 = arith.constant 0 : index
    %c0_46 = arith.constant 0 : index
    %97 = vector.load %arg7[%c0_45, %c0_46] : memref<1x32xf32, #tpu.memory_space<vmem>>, vector<1x32xf32>
    %98 = vector.broadcast %97 : vector<1x32xf32> to vector<8x32xf32>
    %99 = arith.addf %96, %98 : vector<8x32xf32>
    %100 = arith.mulf %99, %99 : vector<8x32xf32>
    %cst_47 = arith.constant dense<0.000000e+00> : vector<8xf32>
    %101 = vector.multi_reduction <add>, %100, %cst_47 [1] : vector<8x32xf32> to vector<8xf32>
    %102 = vector.shape_cast %101 : vector<8xf32> to vector<8x1xf32>
    %cst_48 = arith.constant 1.000000e-24 : f32
    %103 = vector.broadcast %cst_48 : f32 to vector<8x1xf32>
    %104 = arith.maximumf %102, %103 : vector<8x1xf32>
    %105 = math.rsqrt %104 : vector<8x1xf32>
    %106 = vector.broadcast %105 : vector<8x1xf32> to vector<8x32xf32>
    %107 = arith.mulf %99, %106 : vector<8x32xf32>
    %108 = arith.truncf %107 : vector<8x32xf32> to vector<8x32xbf16>
    %c0_49 = arith.constant 0 : index
    %c0_50 = arith.constant 0 : index
    %109 = vector.load %arg8[%c0_49, %c0_50] : memref<8x32xbf16, #tpu.memory_space<vmem>>, vector<8x32xbf16>
    tpu.vector_store %arg8[%c0_49, %c0_50], %108 {strides = array<i32>} : memref<8x32xbf16, #tpu.memory_space<vmem>>, vector<8x32xbf16>,
    return
  }
  func.func @transform_0(%arg0: i32) -> (i32, i32) {
    %c0_i32 = arith.constant 0 : i32
    %c0_i32_0 = arith.constant 0 : i32
    return %arg0, %c0_i32 : i32, i32
  }
  func.func @transform_1(%arg0: i32) -> (i32, i32) {
    %c0_i32 = arith.constant 0 : i32
    %c0_i32_0 = arith.constant 0 : i32
    %c0_i32_1 = arith.constant 0 : i32
    return %c0_i32, %c0_i32_0 : i32, i32
  }
  func.func @transform_2(%arg0: i32) -> (i32, i32) {
    %c0_i32 = arith.constant 0 : i32
    %c0_i32_0 = arith.constant 0 : i32
    %c0_i32_1 = arith.constant 0 : i32
    return %c0_i32, %c0_i32_0 : i32, i32
  }
  func.func @transform_3(%arg0: i32) -> (i32, i32) {
    %c0_i32 = arith.constant 0 : i32
    %c0_i32_0 = arith.constant 0 : i32
    %c0_i32_1 = arith.constant 0 : i32
    return %c0_i32, %c0_i32_0 : i32, i32
  }
  func.func @transform_4(%arg0: i32) -> (i32, i32) {
    %c0_i32 = arith.constant 0 : i32
    %c0_i32_0 = arith.constant 0 : i32
    %c0_i32_1 = arith.constant 0 : i32
    return %c0_i32, %c0_i32_0 : i32, i32
  }
  func.func @transform_5(%arg0: i32) -> (i32, i32) {
    %c0_i32 = arith.constant 0 : i32
    %c0_i32_0 = arith.constant 0 : i32
    %c0_i32_1 = arith.constant 0 : i32
    return %c0_i32, %c0_i32_0 : i32, i32
  }
  func.func @transform_6(%arg0: i32) -> (i32, i32) {
    %c0_i32 = arith.constant 0 : i32
    %c0_i32_0 = arith.constant 0 : i32
    %c0_i32_1 = arith.constant 0 : i32
    return %c0_i32, %c0_i32_0 : i32, i32
  }
  func.func @transform_7(%arg0: i32) -> (i32, i32) {
    %c0_i32 = arith.constant 0 : i32
    %c0_i32_0 = arith.constant 0 : i32
    return %arg0, %c0_i32 : i32, i32
  }
}

</mosaic_0001>

<llo_original>
// kernel: tpu_custom_call.1
$region0: #{tpu_custom_call.1}
  #allocation0 [shape = 'u32[]', space=smem, size = 0x4, offset = 0x4, fixed_abs, tag = 'smem constant byte address 0x4 - core index']
  #allocation1 [shape = 'u32[72,128]{1,0:T(1,128)}', space=vmem, size = 0x9000, scoped, tag = 'internal scratch']
  %s0 = inlined_call_operand.hbm [shape: bf16[8,32], index: 0, kind: input, shape index: {}]
  %s1 = inlined_call_operand.vmem [shape: bf16[32,64], index: 1, kind: input, shape index: {}]
  %s2 = inlined_call_operand.vmem [shape: f32[1,64], index: 2, kind: input, shape index: {}]
  %s3 = inlined_call_operand.vmem [shape: bf16[64,64], index: 3, kind: input, shape index: {}]
  %s4 = inlined_call_operand.vmem [shape: f32[1,64], index: 4, kind: input, shape index: {}]
  %s5 = inlined_call_operand.vmem [shape: bf16[64,32], index: 5, kind: input, shape index: {}]
  %s6 = inlined_call_operand.vmem [shape: f32[1,32], index: 6, kind: input, shape index: {}]
  %s7 = inlined_call_operand.hbm [shape: bf16[8,32], index: 7, kind: output, shape index: {}]
  %s8 = sld [smem:[#allocation0]]
  $region42: #{tpu_custom_call.1} parent=0
    _
  %s10 = ssub.s32 1, %s8
  %s11 = scalar_select 0, %s10, %s8
  $region1: #{tpu_custom_call.1} parent=0
    #allocation2 [shape = 'u8[2048]{0}', space=vmem, size = 0x800, scoped, tag = 'input window, operand 0, single buffered']
    #allocation3 [shape = 's32[1]{0}', space=sflag, size = 0x4, scoped, tag = 'scoped memory for tpu_custom_call.1']
    #allocation4 [shape = 's32[1]{0}', space=sflag, size = 0x4, scoped, tag = 'scoped memory for tpu_custom_call.1']
    #allocation5 [shape = 'u8[2048]{0}', space=vmem, size = 0x800, scoped, tag = 'output window, operand 0, single buffered']
    %12 = vsyncpa [#allocation3], 0
    %13 = vsyncpa [#allocation4], 0
    // Predicated region
    $region2: #{tpu_custom_call.1} parent=1 // pred_check
      _
    $region3: #{tpu_custom_call.1} parent=1 // pred_check_branch
      %15 = sbr.rel (0) target = $region5
    $region4: #{tpu_custom_call.1} parent=1 // pred_region
      %17 = vsyncadd [#allocation3], 0
      %s19 = sshll.u32 %s0, 4
      %s20 = int_to_ptr.hbm [resolvable:$true] %s19
      %s21 = sshll.u32 [#allocation2], 4
      %s22 = int_to_ptr.vmem [resolvable:$true] %s21
      %24 = dma.hbm_to_vmem [thread:$0]  %s20, 64, %s22, [#allocation3]
    $region5: #{tpu_custom_call.1} parent=1 // pred_fallthru
      _
    // Predicated region
    $region6: #{tpu_custom_call.1} parent=1 // pred_check
      _
    $region7: #{tpu_custom_call.1} parent=1 // pred_check_branch
      %26 = sbr.rel (0) target = $region9
    $region8: #{tpu_custom_call.1} parent=1 // pred_region
      _
    $region9: #{tpu_custom_call.1} parent=1 // pred_fallthru
      _
    // Predicated region
    $region10: #{tpu_custom_call.1} parent=1 // pred_check
      _
    $region11: #{tpu_custom_call.1} parent=1 // pred_check_branch
      %28 = sbr.rel (0) target = $region13
    $region12: #{tpu_custom_call.1} parent=1 // pred_region
      _
    $region13: #{tpu_custom_call.1} parent=1 // pred_fallthru
      _
    // Predicated region
    $region14: #{tpu_custom_call.1} parent=1 // pred_check
      _
    $region15: #{tpu_custom_call.1} parent=1 // pred_check_branch
      %30 = sbr.rel (0) target = $region17
    $region16: #{tpu_custom_call.1} parent=1 // pred_region
      _
    $region17: #{tpu_custom_call.1} parent=1 // pred_fallthru
      _
    // Predicated region
    $region18: #{tpu_custom_call.1} parent=1 // pred_check
      _
    $region19: #{tpu_custom_call.1} parent=1 // pred_check_branch
      %32 = sbr.rel (0) target = $region21
    $region20: #{tpu_custom_call.1} parent=1 // pred_region
      _
    $region21: #{tpu_custom_call.1} parent=1 // pred_fallthru
      _
    // Predicated region
    $region22: #{tpu_custom_call.1} parent=1 // pred_check
      _
    $region23: #{tpu_custom_call.1} parent=1 // pred_check_branch
      %34 = sbr.rel (0) target = $region25
    $region24: #{tpu_custom_call.1} parent=1 // pred_region
      _
    $region25: #{tpu_custom_call.1} parent=1 // pred_fallthru
      _
    // Predicated region
    $region26: #{tpu_custom_call.1} parent=1 // pred_check
      _
    $region27: #{tpu_custom_call.1} parent=1 // pred_check_branch
      %36 = sbr.rel (0) target = $region29
    $region28: #{tpu_custom_call.1} parent=1 // pred_region
      _
    $region29: #{tpu_custom_call.1} parent=1 // pred_fallthru
      _
    // Predicated region
    $region30: #{tpu_custom_call.1} parent=1 // pred_check
      _
    $region31: #{tpu_custom_call.1} parent=1 // pred_check_branch
      %38 = sbr.rel (0) target = $region33
    $region32: #{tpu_custom_call.1} parent=1 // pred_region
      %40 = dma.done [#allocation3], 64
    $region33: #{tpu_custom_call.1} parent=1 // pred_fallthru
      _
    %v42 = vld [vmem:[#allocation2] sm:$0xf]
    %v43 = vld [vmem:[%s1] sm:$0xf]
    %v44 = vld [vmem:[%s1 + $0x4] sm:$0xf]
    %v45 = vld [vmem:[%s1 + $0x8] sm:$0xf]
    %v46 = vld [vmem:[%s1 + $0xc] sm:$0xf]
    %v47 = vld [vmem:[%s2] sm:$0x1]
    %v49 = vperm.slane %v47, 0
    %v55 = vunpack.c.l.b16 %v43
    %v56 = vunpack.c.l.b16 %v44
    %v57 = vunpack.c.l.b16 %v45
    %v58 = vunpack.c.l.b16 %v46
    %v59 = vpack.c.b16 %v56, %v55
    %v60 = vpack.c.b16 %v58, %v57
    %vm63 = vcmask 261120
    %v65 = vsel %vm63, %v42, 0
    %67 = vmatpush.bf16.msra.mxu0 0
    %68 = vmatpush.bf16.msra.mxu0 0
    %69 = vmatpush.bf16.msra.mxu0 0
    %70 = vmatpush.bf16.msra.mxu0 0
    %71 = vmatpush.bf16.msra.mxu0 0
    %72 = vmatpush.bf16.msra.mxu0 0
    %73 = vmatpush.bf16.msra.mxu0 %v60
    %74 = vmatpush.bf16.msra.mxu0 %v59
    %75 = vmatmul.bf16.gmra.mxu0 %v65
    %v76 = vpop.f32.mrf.mxu0
    %v77 = vadd.f32 %v49, %v76
    %v78 = vpop.f32.mrf.mxu0
    %79 = vdwg.mxu0
    %v80 = vmul.f32 %v77, 0.5
    %v81 = vmul.f32 %v77, 0.70710677
    %vm82 = vcmp.ge.f32.partialorder %v81, 0.0
    %v83 = vsel %vm82, 1.0, -1.0
    %v84 = vand.u32 2147483647, %v81
    %v85 = vmul.f32 %v84, 0.3275911
    %v86 = vadd.f32 %v85, 1.0
    %v87 = vrcp.pop %v86
    %v88 = vmul.f32 %v86, %v87
    %v89 = vsub.f32 1.0, %v88
    %v90 = vmul.f32 %v87, %v89
    %v91 = vadd.f32 %v87, %v90
    %vm92 = vweird.f32 %v86
    %vm93 = vweird.f32 %v87
    %vm94 = vmor %vm92, %vm93
    %v95 = vsel %vm94, %v87, %v91
    %v96 = vand.u32 2147483647, %v86
    %vm97 = vcmp.eq.f32.partialorder %v96, 8.507059e+37
    %v98 = vand.u32 %v86, 2147483648
    %v99 = vor.u32 1.1754944e-38, %v98
    %v100 = vsel %vm97, %v99, %v95
    %v101 = vmul.f32 1.0, %v100
    %v102 = vmul.f32 %v101, 1.0614054
    %v103 = vadd.f32 %v102, -1.4531521
    %v104 = vmul.f32 %v101, %v103
    %v105 = vadd.f32 %v104, 1.4214138
    %v106 = vmul.f32 %v101, %v105
    %v107 = vadd.f32 %v106, -0.28449672
    %v108 = vmul.f32 %v101, %v107
    %v109 = vadd.f32 %v108, 0.2548296
    %v110 = vmul.f32 %v101, %v109
    %v111 = vsub.f32 0.0, %v84
    %v112 = vmul.f32 %v111, %v84
    %v113 = vmul.f32 %v112, 1.442695
    %v114 = vpow.pop %v113
    %v115 = vmul.f32 %v110, %v114
    %v116 = vsub.f32 1.0, %v115
    %v117 = vmul.f32 %v83, %v116
    %v118 = vadd.f32 %v117, 1.0
    %v119 = vmul.f32 %v80, %v118
    %v120 = vpack.c.bf16 %v119, %v119
    %v121 = vld [vmem:[%s3] sm:$0xf]
    %v122 = vld [vmem:[%s3 + $0x4] sm:$0xf]
    %v123 = vld [vmem:[%s3 + $0x8] sm:$0xf]
    %v124 = vld [vmem:[%s3 + $0xc] sm:$0xf]
    %v125 = vld [vmem:[%s3 + $0x10] sm:$0xf]
    %v126 = vld [vmem:[%s3 + $0x14] sm:$0xf]
    %v127 = vld [vmem:[%s3 + $0x18] sm:$0xf]
    %v128 = vld [vmem:[%s3 + $0x1c] sm:$0xf]
    %v129 = vld [vmem:[%s4] sm:$0x1]
    %v131 = vperm.slane %v129, 0
    %v141 = vunpack.c.l.b16 %v121
    %v142 = vunpack.c.l.b16 %v122
    %v143 = vunpack.c.l.b16 %v123
    %v144 = vunpack.c.l.b16 %v124
    %v145 = vunpack.c.l.b16 %v125
    %v146 = vunpack.c.l.b16 %v126
    %v147 = vunpack.c.l.b16 %v127
    %v148 = vunpack.c.l.b16 %v128
    %v149 = vpack.c.b16 %v142, %v141
    %v150 = vpack.c.b16 %v144, %v143
    %v151 = vpack.c.b16 %v146, %v145
    %v152 = vpack.c.b16 %v148, %v147
    %vm157 = vcmask 523264
    %v159 = vsel %vm157, %v120, 0
    %161 = vmatpush.bf16.msra.mxu0 0
    %162 = vmatpush.bf16.msra.mxu0 0
    %163 = vmatpush.bf16.msra.mxu0 0
    %164 = vmatpush.bf16.msra.mxu0 0
    %165 = vmatpush.bf16.msra.mxu0 %v152
    %166 = vmatpush.bf16.msra.mxu0 %v151
    %167 = vmatpush.bf16.msra.mxu0 %v150
    %168 = vmatpush.bf16.msra.mxu0 %v149
    %169 = vmatmul.bf16.gmra.mxu0 %v159
    %v170 = vpop.f32.mrf.mxu0
    %v171 = vadd.f32 %v131, %v170
    %v172 = vpop.f32.mrf.mxu0
    %173 = vdwg.mxu0
    %v174 = vmul.f32 %v171, 0.5
    %v175 = vmul.f32 %v171, 0.70710677
    %vm176 = vcmp.ge.f32.partialorder %v175, 0.0
    %v177 = vsel %vm176, 1.0, -1.0
    %v178 = vand.u32 2147483647, %v175
    %v179 = vmul.f32 %v178, 0.3275911
    %v180 = vadd.f32 %v179, 1.0
    %v181 = vrcp.pop %v180
    %v182 = vmul.f32 %v180, %v181
    %v183 = vsub.f32 1.0, %v182
    %v184 = vmul.f32 %v181, %v183
    %v185 = vadd.f32 %v181, %v184
    %vm186 = vweird.f32 %v180
    %vm187 = vweird.f32 %v181
    %vm188 = vmor %vm186, %vm187
    %v189 = vsel %vm188, %v181, %v185
    %v190 = vand.u32 2147483647, %v180
    %vm191 = vcmp.eq.f32.partialorder %v190, 8.507059e+37
    %v192 = vand.u32 %v180, 2147483648
    %v193 = vor.u32 1.1754944e-38, %v192
    %v194 = vsel %vm191, %v193, %v189
    %v195 = vmul.f32 1.0, %v194
    %v196 = vmul.f32 %v195, 1.0614054
    %v197 = vadd.f32 %v196, -1.4531521
    %v198 = vmul.f32 %v195, %v197
    %v199 = vadd.f32 %v198, 1.4214138
    %v200 = vmul.f32 %v195, %v199
    %v201 = vadd.f32 %v200, -0.28449672
    %v202 = vmul.f32 %v195, %v201
    %v203 = vadd.f32 %v202, 0.2548296
    %v204 = vmul.f32 %v195, %v203
    %v205 = vsub.f32 0.0, %v178
    %v206 = vmul.f32 %v205, %v178
    %v207 = vmul.f32 %v206, 1.442695
    %v208 = vpow.pop %v207
    %v209 = vmul.f32 %v204, %v208
    %v210 = vsub.f32 1.0, %v209
    %v211 = vmul.f32 %v177, %v210
    %v212 = vadd.f32 %v211, 1.0
    %v213 = vmul.f32 %v174, %v212
    %v214 = vpack.c.bf16 %v213, %v213
    %v215 = vld [vmem:[%s5] sm:$0xf]
    %v216 = vld [vmem:[%s5 + $0x4] sm:$0xf]
    %v217 = vld [vmem:[%s5 + $0x8] sm:$0xf]
    %v218 = vld [vmem:[%s5 + $0xc] sm:$0xf]
    %v219 = vld [vmem:[%s5 + $0x10] sm:$0xf]
    %v220 = vld [vmem:[%s5 + $0x14] sm:$0xf]
    %v221 = vld [vmem:[%s5 + $0x18] sm:$0xf]
    %v222 = vld [vmem:[%s5 + $0x1c] sm:$0xf]
    %v223 = vld [vmem:[%s6] sm:$0x1]
    %v225 = vperm.slane %v223, 0
    %v235 = vunpack.c.l.b16 %v215
    %v236 = vunpack.c.l.b16 %v216
    %v237 = vunpack.c.l.b16 %v217
    %v238 = vunpack.c.l.b16 %v218
    %v239 = vunpack.c.l.b16 %v219
    %v240 = vunpack.c.l.b16 %v220
    %v241 = vunpack.c.l.b16 %v221
    %v242 = vunpack.c.l.b16 %v222
    %v243 = vpack.c.b16 %v236, %v235
    %v244 = vpack.c.b16 %v238, %v237
    %v245 = vpack.c.b16 %v240, %v239
    %v246 = vpack.c.b16 %v242, %v241
    %v252 = vsel %vm157, %v214, 0
    %254 = vmatpush.bf16.msra.mxu0 0
    %255 = vmatpush.bf16.msra.mxu0 0
    %256 = vmatpush.bf16.msra.mxu0 0
    %257 = vmatpush.bf16.msra.mxu0 0
    %258 = vmatpush.bf16.msra.mxu0 %v246
    %259 = vmatpush.bf16.msra.mxu0 %v245
    %260 = vmatpush.bf16.msra.mxu0 %v244
    %261 = vmatpush.bf16.msra.mxu0 %v243
    %262 = vmatmul.bf16.gmra.mxu0 %v252
    %v263 = vpop.f32.mrf.mxu0
    %v264 = vadd.f32 %v225, %v263
    %v265 = vpop.f32.mrf.mxu0
    %266 = vdwg.mxu0
    %v267 = vmul.f32 %v264, %v264
    %v268 = vsel %vm63, %v267, 0.0
    %269 = vadd.xlane.f32.xlu0 %v268
    %v270 = vpop.xlane.xlu0 %269
    %v271 = vmax.f32 %v270, 1e-24
    %v272 = vrsqrt.pop %v271
    %v273 = vmul.f32 %v272, %v271
    %v274 = vmul.f32 %v273, %v272
    %v275 = vmul.f32 0.5, %v274
    %v276 = vsub.f32 1.5, %v275
    %v277 = vmul.f32 %v272, %v276
    %vm278 = vweird.f32 %v271
    %vm279 = vweird.f32 %v272
    %vm280 = vmor %vm278, %vm279
    %v281 = vsel %vm280, %v272, %v277
    %v282 = vmul.f32 %v264, %v281
    %v283 = vpack.c.bf16 %v282, %v282
    %vm284 = vcmask 257024
    %285 = vst.msk [vmem:[#allocation5] sm:$0xf] %vm284, %v283
    // Predicated region
    $region34: #{tpu_custom_call.1} parent=1 // pred_check
      _
    $region35: #{tpu_custom_call.1} parent=1 // pred_check_branch
      %287 = sbr.rel (0) target = $region37
    $region36: #{tpu_custom_call.1} parent=1 // pred_region
      %289 = vsyncadd [#allocation4], 0
      %s291 = sshll.u32 [#allocation5], 4
      %s292 = int_to_ptr.vmem [resolvable:$true] %s291
      %s293 = sshll.u32 %s7, 4
      %s294 = int_to_ptr.hbm [resolvable:$true] %s293
      %296 = dma.vmem_to_hbm [thread:$0]  %s292, 64, %s294, [#allocation4]
    $region37: #{tpu_custom_call.1} parent=1 // pred_fallthru
      _
    // Predicated region
    $region38: #{tpu_custom_call.1} parent=1 // pred_check
      _
    $region39: #{tpu_custom_call.1} parent=1 // pred_check_branch
      %298 = sbr.rel (0) target = $region41
    $region40: #{tpu_custom_call.1} parent=1 // pred_region
      %300 = dma.done [#allocation4], 64
    $region41: #{tpu_custom_call.1} parent=1 // pred_fallthru
      _
    %301 = vsyncpa [#allocation3], 1
    %302 = vsyncpa [#allocation4], 1

// kernel: tpu_custom_call.1
$region0: #{tpu_custom_call.1}
  #allocation0 [shape = 'u32[]', space=smem, size = 0x4, offset = 0x4, fixed_abs, tag = 'smem constant byte address 0x4 - core index']
  #allocation1 [shape = 'u32[72,128]{1,0:T(1,128)}', space=vmem, size = 0x9000, scoped, tag = 'internal scratch']
  %s0 = inlined_call_operand.hbm [shape: bf16[8,32], index: 0, kind: input, shape index: {}]
  %s1 = inlined_call_operand.vmem [shape: bf16[32,64], index: 1, kind: input, shape index: {}]
  %s2 = inlined_call_operand.vmem [shape: f32[1,64], index: 2, kind: input, shape index: {}]
  %s3 = inlined_call_operand.vmem [shape: bf16[64,64], index: 3, kind: input, shape index: {}]
  %s4 = inlined_call_operand.vmem [shape: f32[1,64], index: 4, kind: input, shape index: {}]
  %s5 = inlined_call_operand.vmem [shape: bf16[64,32], index: 5, kind: input, shape index: {}]
  %s6 = inlined_call_operand.vmem [shape: f32[1,32], index: 6, kind: input, shape index: {}]
  %s7 = inlined_call_operand.hbm [shape: bf16[8,32], index: 7, kind: output, shape index: {}]
  %s8 = sld [smem:[#allocation0]]
  $region42: #{tpu_custom_call.1} parent=0
    _
  %s10 = ssub.s32 1, %s8
  %s11 = scalar_select 0, %s10, %s8
  $region1: #{tpu_custom_call.1} parent=0
    #allocation2 [shape = 'u8[2048]{0}', space=vmem, size = 0x800, scoped, tag = 'input window, operand 0, single buffered']
    #allocation3 [shape = 's32[1]{0}', space=sflag, size = 0x4, scoped, tag = 'scoped memory for tpu_custom_call.1']
    #allocation4 [shape = 's32[1]{0}', space=sflag, size = 0x4, scoped, tag = 'scoped memory for tpu_custom_call.1']
    #allocation5 [shape = 'u8[2048]{0}', space=vmem, size = 0x800, scoped, tag = 'output window, operand 0, single buffered']
    %12 = vsyncpa [#allocation3], 0
    %13 = vsyncpa [#allocation4], 0
    // Predicated region
    $region2: #{tpu_custom_call.1} parent=1 // pred_check
      _
    $region3: #{tpu_custom_call.1} parent=1 // pred_check_branch
      %15 = sbr.rel (0) target = $region5
    $region4: #{tpu_custom_call.1} parent=1 // pred_region
      %17 = vsyncadd [#allocation3], 0
      %s19 = sshll.u32 %s0, 4
      %s20 = int_to_ptr.hbm [resolvable:$true] %s19
      %s21 = sshll.u32 [#allocation2], 4
      %s22 = int_to_ptr.vmem [resolvable:$true] %s21
      %24 = dma.hbm_to_vmem [thread:$0]  %s20, 64, %s22, [#allocation3]
    $region5: #{tpu_custom_call.1} parent=1 // pred_fallthru
      _
    // Predicated region
    $region6: #{tpu_custom_call.1} parent=1 // pred_check
      _
    $region7: #{tpu_custom_call.1} parent=1 // pred_check_branch
      %26 = sbr.rel (0) target = $region9
    $region8: #{tpu_custom_call.1} parent=1 // pred_region
      _
    $region9: #{tpu_custom_call.1} parent=1 // pred_fallthru
      _
    // Predicated region
    $region10: #{tpu_custom_call.1} parent=1 // pred_check
      _
    $region11: #{tpu_custom_call.1} parent=1 // pred_check_branch
      %28 = sbr.rel (0) target = $region13
    $region12: #{tpu_custom_call.1} parent=1 // pred_region
      _
    $region13: #{tpu_custom_call.1} parent=1 // pred_fallthru
      _
    // Predicated region
    $region14: #{tpu_custom_call.1} parent=1 // pred_check
      _
    $region15: #{tpu_custom_call.1} parent=1 // pred_check_branch
      %30 = sbr.rel (0) target = $region17
    $region16: #{tpu_custom_call.1} parent=1 // pred_region
      _
    $region17: #{tpu_custom_call.1} parent=1 // pred_fallthru
      _
    // Predicated region
    $region18: #{tpu_custom_call.1} parent=1 // pred_check
      _
    $region19: #{tpu_custom_call.1} parent=1 // pred_check_branch
      %32 = sbr.rel (0) target = $region21
    $region20: #{tpu_custom_call.1} parent=1 // pred_region
      _
    $region21: #{tpu_custom_call.1} parent=1 // pred_fallthru
      _
    // Predicated region
    $region22: #{tpu_custom_call.1} parent=1 // pred_check
      _
    $region23: #{tpu_custom_call.1} parent=1 // pred_check_branch
      %34 = sbr.rel (0) target = $region25
    $region24: #{tpu_custom_call.1} parent=1 // pred_region
      _
    $region25: #{tpu_custom_call.1} parent=1 // pred_fallthru
      _
    // Predicated region
    $region26: #{tpu_custom_call.1} parent=1 // pred_check
      _
    $region27: #{tpu_custom_call.1} parent=1 // pred_check_branch
      %36 = sbr.rel (0) target = $region29
    $region28: #{tpu_custom_call.1} parent=1 // pred_region
      _
    $region29: #{tpu_custom_call.1} parent=1 // pred_fallthru
      _
    // Predicated region
    $region30: #{tpu_custom_call.1} parent=1 // pred_check
      _
    $region31: #{tpu_custom_call.1} parent=1 // pred_check_branch
      %38 = sbr.rel (0) target = $region33
    $region32: #{tpu_custom_call.1} parent=1 // pred_region
      %40 = dma.done [#allocation3], 64
    $region33: #{tpu_custom_call.1} parent=1 // pred_fallthru
      _
    %v42 = vld [vmem:[#allocation2] sm:$0xf]
    %v43 = vld [vmem:[%s1] sm:$0xf]
    %v44 = vld [vmem:[%s1 + $0x4] sm:$0xf]
    %v45 = vld [vmem:[%s1 + $0x8] sm:$0xf]
    %v46 = vld [vmem:[%s1 + $0xc] sm:$0xf]
    %v47 = vld [vmem:[%s2] sm:$0x1]
    %v49 = vperm.slane %v47, 0
    %v55 = vunpack.c.l.b16 %v43
    %v56 = vunpack.c.l.b16 %v44
    %v57 = vunpack.c.l.b16 %v45
    %v58 = vunpack.c.l.b16 %v46
    %v59 = vpack.c.b16 %v56, %v55
    %v60 = vpack.c.b16 %v58, %v57
    %vm63 = vcmask 261120
    %v65 = vsel %vm63, %v42, 0
    %67 = vmatpush.bf16.msra.mxu0 0
    %68 = vmatpush.bf16.msra.mxu0 0
    %69 = vmatpush.bf16.msra.mxu0 0
    %70 = vmatpush.bf16.msra.mxu0 0
    %71 = vmatpush.bf16.msra.mxu0 0
    %72 = vmatpush.bf16.msra.mxu0 0
    %73 = vmatpush.bf16.msra.mxu0 %v60
    %74 = vmatpush.bf16.msra.mxu0 %v59
    %75 = vmatmul.bf16.gmra.mxu0 %v65
    %v76 = vpop.f32.mrf.mxu0
    %v77 = vadd.f32 %v49, %v76
    %v78 = vpop.f32.mrf.mxu0
    %79 = vdwg.mxu0
    %v80 = vmul.f32 %v77, 0.5
    %v81 = vmul.f32 %v77, 0.70710677
    %vm82 = vcmp.ge.f32.partialorder %v81, 0.0
    %v83 = vsel %vm82, 1.0, -1.0
    %v84 = vand.u32 2147483647, %v81
    %v85 = vmul.f32 %v84, 0.3275911
    %v86 = vadd.f32 %v85, 1.0
    %v87 = vrcp.pop %v86
    %v88 = vmul.f32 %v86, %v87
    %v89 = vsub.f32 1.0, %v88
    %v90 = vmul.f32 %v87, %v89
    %v91 = vadd.f32 %v87, %v90
    %vm92 = vweird.f32 %v86
    %vm93 = vweird.f32 %v87
    %vm94 = vmor %vm92, %vm93
    %v95 = vsel %vm94, %v87, %v91
    %v96 = vand.u32 2147483647, %v86
    %vm97 = vcmp.eq.f32.partialorder %v96, 8.507059e+37
    %v98 = vand.u32 %v86, 2147483648
    %v99 = vor.u32 1.1754944e-38, %v98
    %v100 = vsel %vm97, %v99, %v95
    %v101 = vmul.f32 1.0, %v100
    %v102 = vmul.f32 %v101, 1.0614054
    %v103 = vadd.f32 %v102, -1.4531521
    %v104 = vmul.f32 %v101, %v103
    %v105 = vadd.f32 %v104, 1.4214138
    %v106 = vmul.f32 %v101, %v105
    %v107 = vadd.f32 %v106, -0.28449672
    %v108 = vmul.f32 %v101, %v107
    %v109 = vadd.f32 %v108, 0.2548296
    %v110 = vmul.f32 %v101, %v109
    %v111 = vsub.f32 0.0, %v84
    %v112 = vmul.f32 %v111, %v84
    %v113 = vmul.f32 %v112, 1.442695
    %v114 = vpow.pop %v113
    %v115 = vmul.f32 %v110, %v114
    %v116 = vsub.f32 1.0, %v115
    %v117 = vmul.f32 %v83, %v116
    %v118 = vadd.f32 %v117, 1.0
    %v119 = vmul.f32 %v80, %v118
    %v120 = vpack.c.bf16 %v119, %v119
    %v121 = vld [vmem:[%s3] sm:$0xf]
    %v122 = vld [vmem:[%s3 + $0x4] sm:$0xf]
    %v123 = vld [vmem:[%s3 + $0x8] sm:$0xf]
    %v124 = vld [vmem:[%s3 + $0xc] sm:$0xf]
    %v125 = vld [vmem:[%s3 + $0x10] sm:$0xf]
    %v126 = vld [vmem:[%s3 + $0x14] sm:$0xf]
    %v127 = vld [vmem:[%s3 + $0x18] sm:$0xf]
    %v128 = vld [vmem:[%s3 + $0x1c] sm:$0xf]
    %v129 = vld [vmem:[%s4] sm:$0x1]
    %v131 = vperm.slane %v129, 0
    %v141 = vunpack.c.l.b16 %v121
    %v142 = vunpack.c.l.b16 %v122
    %v143 = vunpack.c.l.b16 %v123
    %v144 = vunpack.c.l.b16 %v124
    %v145 = vunpack.c.l.b16 %v125
    %v146 = vunpack.c.l.b16 %v126
    %v147 = vunpack.c.l.b16 %v127
    %v148 = vunpack.c.l.b16 %v128
    %v149 = vpack.c.b16 %v142, %v141
    %v150 = vpack.c.b16 %v144, %v143
    %v151 = vpack.c.b16 %v146, %v145
    %v152 = vpack.c.b16 %v148, %v147
    %vm157 = vcmask 523264
    %v159 = vsel %vm157, %v120, 0
    %161 = vmatpush.bf16.msra.mxu0 0
    %162 = vmatpush.bf16.msra.mxu0 0
    %163 = vmatpush.bf16.msra.mxu0 0
    %164 = vmatpush.bf16.msra.mxu0 0
    %165 = vmatpush.bf16.msra.mxu0 %v152
    %166 = vmatpush.bf16.msra.mxu0 %v151
    %167 = vmatpush.bf16.msra.mxu0 %v150
    %168 = vmatpush.bf16.msra.mxu0 %v149
    %169 = vmatmul.bf16.gmra.mxu0 %v159
    %v170 = vpop.f32.mrf.mxu0
    %v171 = vadd.f32 %v131, %v170
    %v172 = vpop.f32.mrf.mxu0
    %173 = vdwg.mxu0
    %v174 = vmul.f32 %v171, 0.5
    %v175 = vmul.f32 %v171, 0.70710677
    %vm176 = vcmp.ge.f32.partialorder %v175, 0.0
    %v177 = vsel %vm176, 1.0, -1.0
    %v178 = vand.u32 2147483647, %v175
    %v179 = vmul.f32 %v178, 0.3275911
    %v180 = vadd.f32 %v179, 1.0
    %v181 = vrcp.pop %v180
    %v182 = vmul.f32 %v180, %v181
    %v183 = vsub.f32 1.0, %v182
    %v184 = vmul.f32 %v181, %v183
    %v185 = vadd.f32 %v181, %v184
    %vm186 = vweird.f32 %v180
    %vm187 = vweird.f32 %v181
    %vm188 = vmor %vm186, %vm187
    %v189 = vsel %vm188, %v181, %v185
    %v190 = vand.u32 2147483647, %v180
    %vm191 = vcmp.eq.f32.partialorder %v190, 8.507059e+37
    %v192 = vand.u32 %v180, 2147483648
    %v193 = vor.u32 1.1754944e-38, %v192
    %v194 = vsel %vm191, %v193, %v189
    %v195 = vmul.f32 1.0, %v194
    %v196 = vmul.f32 %v195, 1.0614054
    %v197 = vadd.f32 %v196, -1.4531521
    %v198 = vmul.f32 %v195, %v197
    %v199 = vadd.f32 %v198, 1.4214138
    %v200 = vmul.f32 %v195, %v199
    %v201 = vadd.f32 %v200, -0.28449672
    %v202 = vmul.f32 %v195, %v201
    %v203 = vadd.f32 %v202, 0.2548296
    %v204 = vmul.f32 %v195, %v203
    %v205 = vsub.f32 0.0, %v178
    %v206 = vmul.f32 %v205, %v178
    %v207 = vmul.f32 %v206, 1.442695
    %v208 = vpow.pop %v207
    %v209 = vmul.f32 %v204, %v208
    %v210 = vsub.f32 1.0, %v209
    %v211 = vmul.f32 %v177, %v210
    %v212 = vadd.f32 %v211, 1.0
    %v213 = vmul.f32 %v174, %v212
    %v214 = vpack.c.bf16 %v213, %v213
    %v215 = vld [vmem:[%s5] sm:$0xf]
    %v216 = vld [vmem:[%s5 + $0x4] sm:$0xf]
    %v217 = vld [vmem:[%s5 + $0x8] sm:$0xf]
    %v218 = vld [vmem:[%s5 + $0xc] sm:$0xf]
    %v219 = vld [vmem:[%s5 + $0x10] sm:$0xf]
    %v220 = vld [vmem:[%s5 + $0x14] sm:$0xf]
    %v221 = vld [vmem:[%s5 + $0x18] sm:$0xf]
    %v222 = vld [vmem:[%s5 + $0x1c] sm:$0xf]
    %v223 = vld [vmem:[%s6] sm:$0x1]
    %v225 = vperm.slane %v223, 0
    %v235 = vunpack.c.l.b16 %v215
    %v236 = vunpack.c.l.b16 %v216
    %v237 = vunpack.c.l.b16 %v217
    %v238 = vunpack.c.l.b16 %v218
    %v239 = vunpack.c.l.b16 %v219
    %v240 = vunpack.c.l.b16 %v220
    %v241 = vunpack.c.l.b16 %v221
    %v242 = vunpack.c.l.b16 %v222
    %v243 = vpack.c.b16 %v236, %v235
    %v244 = vpack.c.b16 %v238, %v237
    %v245 = vpack.c.b16 %v240, %v239
    %v246 = vpack.c.b16 %v242, %v241
    %v252 = vsel %vm157, %v214, 0
    %254 = vmatpush.bf16.msra.mxu0 0
    %255 = vmatpush.bf16.msra.mxu0 0
    %256 = vmatpush.bf16.msra.mxu0 0
    %257 = vmatpush.bf16.msra.mxu0 0
    %258 = vmatpush.bf16.msra.mxu0 %v246
    %259 = vmatpush.bf16.msra.mxu0 %v245
    %260 = vmatpush.bf16.msra.mxu0 %v244
    %261 = vmatpush.bf16.msra.mxu0 %v243
    %262 = vmatmul.bf16.gmra.mxu0 %v252
    %v263 = vpop.f32.mrf.mxu0
    %v264 = vadd.f32 %v225, %v263
    %v265 = vpop.f32.mrf.mxu0
    %266 = vdwg.mxu0
    %v267 = vmul.f32 %v264, %v264
    %v268 = vsel %vm63, %v267, 0.0
    %269 = vadd.xlane.f32.xlu0 %v268
    %v270 = vpop.xlane.xlu0 %269
    %v271 = vmax.f32 %v270, 1e-24
    %v272 = vrsqrt.pop %v271
    %v273 = vmul.f32 %v272, %v271
    %v274 = vmul.f32 %v273, %v272
    %v275 = vmul.f32 0.5, %v274
    %v276 = vsub.f32 1.5, %v275
    %v277 = vmul.f32 %v272, %v276
    %vm278 = vweird.f32 %v271
    %vm279 = vweird.f32 %v272
    %vm280 = vmor %vm278, %vm279
    %v281 = vsel %vm280, %v272, %v277
    %v282 = vmul.f32 %v264, %v281
    %v283 = vpack.c.bf16 %v282, %v282
    %vm284 = vcmask 257024
    %285 = vst.msk [vmem:[#allocation5] sm:$0xf] %vm284, %v283
    // Predicated region
    $region34: #{tpu_custom_call.1} parent=1 // pred_check
      _
    $region35: #{tpu_custom_call.1} parent=1 // pred_check_branch
      %287 = sbr.rel (0) target = $region37
    $region36: #{tpu_custom_call.1} parent=1 // pred_region
      %289 = vsyncadd [#allocation4], 0
      %s291 = sshll.u32 [#allocation5], 4
      %s292 = int_to_ptr.vmem [resolvable:$true] %s291
      %s293 = sshll.u32 %s7, 4
      %s294 = int_to_ptr.hbm [resolvable:$true] %s293
      %296 = dma.vmem_to_hbm [thread:$0]  %s292, 64, %s294, [#allocation4]
    $region37: #{tpu_custom_call.1} parent=1 // pred_fallthru
      _
    // Predicated region
    $region38: #{tpu_custom_call.1} parent=1 // pred_check
      _
    $region39: #{tpu_custom_call.1} parent=1 // pred_check_branch
      %298 = sbr.rel (0) target = $region41
    $region40: #{tpu_custom_call.1} parent=1 // pred_region
      %300 = dma.done [#allocation4], 64
    $region41: #{tpu_custom_call.1} parent=1 // pred_fallthru
      _
    %301 = vsyncpa [#allocation3], 1
    %302 = vsyncpa [#allocation4], 1

</llo_original>
